<compile_context>
chip_gen: v6e
topology: v6e:2x2x1
jax: 0.10.0
libtpu: 0.0.40
codegen_flags: <defaults>
</compile_context>

<pallas_src>
import functools
import math

import jax
import jax.numpy as jnp
import numpy as np
from jax.experimental import pallas as pl
from jax.experimental.pallas import tpu as pltpu

EPS = 1e-5          # nn.BatchNorm1d default eps
LANE = 128
SUBLANE = 8


def _round_up(x, m):
    return (x + m - 1) // m * m


# --------------------------------------------------------------------------- #
# Kernel
# --------------------------------------------------------------------------- #
def _glu_kernel(x_ref, w_ref, gb_ref, o_ref, *,
                vbs, vb_per_step, o_pad, output_dim, approx_sigmoid):
    """One grid step = `vb_per_step` consecutive virtual batches.

    x_ref : (rows, input_dim)      rows = vb_per_step * vbs   (input dtype)
    w_ref : (input_dim, 2*o_pad)   fused [W_value^T | W_gate^T], bf16, resident
    gb_ref: (2, 2*o_pad)           row 0 = gamma, row 1 = beta (value||gate), f32
    o_ref : (rows, output_dim)     gated output, only the real columns stored
    """
    rows = vb_per_step * vbs
    two_o_pad = 2 * o_pad

    # Single fused MXU matmul, bf16 operands, f32 accumulation.
    x = x_ref[...].astype(w_ref.dtype)
    y = jnp.dot(x, w_ref[...], preferred_element_type=jnp.float32)  # (rows, 2*o_pad)

    # Per-virtual-batch view: sublane-group reshape (layout-cheap).
    y3 = y.reshape(vb_per_step, vbs, two_o_pad)

    gamma = gb_ref[0:1, :].reshape(1, 1, two_o_pad)
    beta = gb_ref[1:2, :].reshape(1, 1, two_o_pad)

    # Single-pass training-mode GhostBatchNorm (biased variance). gamma is
    # folded into the rsqrt scale and the mean into the shift, so normalizing
    # each element is one multiply-add.
    inv_n = 1.0 / vbs
    s1 = jnp.sum(y3, axis=1, keepdims=True)               # (K, 1, 2*o_pad)
    s2 = jnp.sum(y3 * y3, axis=1, keepdims=True)
    mean = s1 * inv_n
    var = jnp.maximum(s2 * inv_n - mean * mean, 0.0)       # guard cancellation
    scale = jax.lax.rsqrt(var + EPS) * gamma
    shift = beta - mean * scale
    y_bn = y3 * scale + shift                              # (K, vbs, 2*o_pad)

    # GLU split at the tile-aligned o_pad boundary.
    v = y_bn[:, :, :o_pad]
    g = y_bn[:, :, o_pad:]
    # sigmoid(g) = 1 / (1 + exp(-g)); exp rides the EUP slot. The approximate
    # reciprocal (EUP, ~1e-4 rel. error) is opt-in via approx_sigmoid.
    gate = pl.reciprocal(1.0 + jnp.exp(-g), approx=approx_sigmoid)

    gated = (v * gate).reshape(rows, o_pad)
    o_ref[...] = gated[:, :output_dim].astype(o_ref.dtype)


# --------------------------------------------------------------------------- #
# One-time parameter prep (cache this in real use)
# --------------------------------------------------------------------------- #
def prepare_glu_params(weight, gamma, beta, *, input_dim, output_dim,
                       compute_dtype=jnp.bfloat16):
    """Split GLU halves, transpose, lane-pad each half to o_pad, fuse into one
    (input_dim, 2*o_pad) weight slab (bf16), and stack gamma/beta into one
    (2, 2*o_pad) f32 slab. Padded columns are exactly zero (see invariant)."""
    assert weight.shape == (2 * output_dim, input_dim)
    o_pad = _round_up(output_dim, LANE)

    def pad_wt(w_half):                                   # (O, D) -> (D, o_pad)
        wt = jnp.transpose(w_half)
        return jnp.pad(wt, ((0, 0), (0, o_pad - output_dim)))

    w_fused = jnp.concatenate(
        [pad_wt(weight[:output_dim]), pad_wt(weight[output_dim:])], axis=1
    ).astype(compute_dtype)                               # (D, 2*o_pad)

    def pad_vec(v_half):                                  # (O,) -> (o_pad,)
        return jnp.pad(v_half, (0, o_pad - output_dim))

    gamma_row = jnp.concatenate([pad_vec(gamma[:output_dim]),
                                 pad_vec(gamma[output_dim:])])
    beta_row = jnp.concatenate([pad_vec(beta[:output_dim]),
                                pad_vec(beta[output_dim:])])
    gb = jnp.stack([gamma_row, beta_row]).astype(jnp.float32)   # (2, 2*o_pad)

    return dict(w=w_fused, gb=gb, o_pad=o_pad,
                input_dim=input_dim, output_dim=output_dim)


# --------------------------------------------------------------------------- #
# Grid-step sizing (rows per step) with a VMEM budget sized for v7x (64 MiB)
# --------------------------------------------------------------------------- #
def _vmem_estimate_bytes(rows, input_dim, o_pad, output_dim, in_bytes, w_bytes):
    x_buf = 2 * rows * input_dim * in_bytes               # double-buffered input
    o_buf = 2 * rows * output_dim * in_bytes              # double-buffered output
    w_buf = 2 * input_dim * 2 * o_pad * w_bytes           # resident weight slab
    p_buf = 2 * 2 * 2 * o_pad * 4                         # gamma/beta slab
    interm = 3 * rows * 2 * o_pad * 4                     # y / y_bn / temporaries (f32)
    return x_buf + o_buf + w_buf + p_buf + interm


def _choose_vb_per_step(num_vb, vbs, *, input_dim, o_pad, output_dim,
                        in_bytes, w_bytes, target_rows=2048, min_steps=4,
                        vmem_budget_bytes=24 * 1024 * 1024):
    """Largest K (virtual batches fused per step) that divides num_vb, keeps
    K*vbs <= target_rows, fits the VMEM budget, and — when possible — leaves an
    even grid of >= min_steps steps so both v7x TensorCores pipeline work."""
    def fits(k):
        rows = k * vbs
        return (rows <= target_rows and
                _vmem_estimate_bytes(rows, input_dim, o_pad, output_dim,
                                     in_bytes, w_bytes) <= vmem_budget_bytes)

    divisors = [k for k in range(1, num_vb + 1) if num_vb % k == 0 and fits(k)]
    if not divisors:
        return 1
    preferred = [k for k in divisors
                 if (num_vb // k) >= min_steps and (num_vb // k) % 2 == 0]
    return max(preferred) if preferred else max(divisors)


# --------------------------------------------------------------------------- #
# Wrapper
# --------------------------------------------------------------------------- #
def gated_linear_unit(x, params, *, virtual_batch_size, target_rows=2048,
                      min_steps=4, vmem_budget_bytes=24 * 1024 * 1024,
                      approx_sigmoid=False):
    """x: (B, input_dim) -> (B, output_dim). Training-mode GhostBatchNorm GLU."""
    B, D = x.shape
    assert D == params["input_dim"]
    # torch.chunk allows a ragged last virtual batch; this kernel requires
    # divisibility (documented deviation — do not drop this assert silently).
    assert B % virtual_batch_size == 0, "batch must be divisible by virtual_batch_size"
    assert virtual_batch_size % SUBLANE == 0, "virtual_batch_size must be a multiple of 8"
    num_vb = B // virtual_batch_size

    o_pad = params["o_pad"]
    output_dim = params["output_dim"]
    k = _choose_vb_per_step(
        num_vb, virtual_batch_size, input_dim=D, o_pad=o_pad,
        output_dim=output_dim, in_bytes=x.dtype.itemsize,
        w_bytes=params["w"].dtype.itemsize, target_rows=target_rows,
        min_steps=min_steps, vmem_budget_bytes=vmem_budget_bytes)
    rows = k * virtual_batch_size
    grid = (num_vb // k,)

    kernel = functools.partial(
        _glu_kernel, vbs=virtual_batch_size, vb_per_step=k, o_pad=o_pad,
        output_dim=output_dim, approx_sigmoid=approx_sigmoid)

    return pl.pallas_call(
        kernel,
        out_shape=jax.ShapeDtypeStruct((B, output_dim), x.dtype),
        grid_spec=pltpu.PrefetchScalarGridSpec(
            num_scalar_prefetch=0,
            grid=grid,
            in_specs=[
                # x slab: K fused virtual batches; full last-dim block (no pad).
                pl.BlockSpec((rows, D), lambda i: (i, 0)),
                # fused [W_value^T | W_gate^T] slab, resident (constant index).
                pl.BlockSpec((D, 2 * o_pad), lambda i: (0, 0)),
                # stacked gamma/beta slab, resident.
                pl.BlockSpec((2, 2 * o_pad), lambda i: (0, 0)),
            ],
            # Narrow output block: only the real output_dim columns hit HBM.
            out_specs=pl.BlockSpec((rows, output_dim), lambda i: (i, 0)),
        ),
        compiler_params=pltpu.CompilerParams(
            dimension_semantics=("parallel",),
            vmem_limit_bytes=48 * 1024 * 1024,
        ),
    )(x, params["w"], params["gb"])


# --------------------------------------------------------------------------- #
# Pure-JAX reference (mirrors the PyTorch forward; optionally quantizes the
# matmul operands to the kernel's compute dtype for an apples-to-apples check)
# --------------------------------------------------------------------------- #
def _reference(x, weight, gamma, beta, *, output_dim, virtual_batch_size,
               compute_dtype=jnp.float32):
    xq = x.astype(compute_dtype).astype(jnp.float32)
    wq = weight.astype(compute_dtype).astype(jnp.float32)
    y = xq @ wq.T
    B = x.shape[0]
    n_chunks = int(math.ceil(B / virtual_batch_size))
    outs = []
    for c in jnp.split(y, n_chunks, axis=0):
        mean = jnp.mean(c, axis=0, keepdims=True)
        var = jnp.mean((c - mean) ** 2, axis=0, keepdims=True)   # biased
        outs.append(gamma * (c - mean) / jnp.sqrt(var + EPS) + beta)
    y_bn = jnp.concatenate(outs, axis=0)
    return y_bn[:, :output_dim] * jax.nn.sigmoid(y_bn[:, output_dim:])


if __name__ == "__main__":
    input_dim = 16
    output_dim = 8
    virtual_batch_size = 32
    batch = 256        # 8 virtual batches -> grid of 4 steps, 2 fused VBs each

    key = jax.random.PRNGKey(0)
    kx, kw, kg, kb = jax.random.split(key, 4)
    x = jax.random.normal(kx, (batch, input_dim), dtype=jnp.float32)
    weight = jax.random.normal(kw, (2 * output_dim, input_dim), dtype=jnp.float32) * 0.1
    gamma = 1.0 + 0.1 * jax.random.normal(kg, (2 * output_dim,), dtype=jnp.float32)
    beta = 0.1 * jax.random.normal(kb, (2 * output_dim,), dtype=jnp.float32)

    # One-time parameter prep (fuse halves, transpose, pad, bf16) — cache in real use.
    params = prepare_glu_params(weight, gamma, beta,
                                input_dim=input_dim, output_dim=output_dim,
                                compute_dtype=jnp.bfloat16)

    out = gated_linear_unit(x, params, virtual_batch_size=virtual_batch_size)
    out = jax.block_until_ready(out)

    # Reference with the same bf16-quantized matmul operands (the kernel's MXU
    # inputs); BN/GLU epilogue is f32 in both, so tolerance stays tight.
    ref = _reference(x, weight, gamma, beta, output_dim=output_dim,
                     virtual_batch_size=virtual_batch_size,
                     compute_dtype=jnp.bfloat16)
    np.testing.assert_allclose(np.asarray(out), np.asarray(ref), rtol=5e-3, atol=5e-3)
    print("KERNEL_OK")
</pallas_src>

<mosaic_0001>
module attributes {stable_mosaic.version = 11 : i64} {
  func.func @_glu_kernel(%arg0: i32, %arg1: memref<64x16xf32, #tpu.memory_space<vmem>>, %arg2: memref<16x256xbf16, #tpu.memory_space<vmem>>, %arg3: memref<2x256xf32, #tpu.memory_space<vmem>>, %arg4: memref<64x8xf32, #tpu.memory_space<vmem>>) attributes {dimension_semantics = [#tpu.dimension_semantics<parallel>], iteration_bounds = array<i64: 4>, scalar_prefetch = 0 : i64, scratch_operands = 0 : i64, tpu.core_type = #tpu.core_type<tc>, window_params = [{transform_indices = @transform_0, window_bounds = array<i64: 64, 16>}, {pipeline_mode = #tpu.pipeline_mode<synchronous>, transform_indices = @transform_1, window_bounds = array<i64: 16, 256>}, {pipeline_mode = #tpu.pipeline_mode<synchronous>, transform_indices = @transform_2, window_bounds = array<i64: 2, 256>}, {transform_indices = @transform_3, window_bounds = array<i64: 64, 8>}]} {
    %c0 = arith.constant 0 : index
    %c0_0 = arith.constant 0 : index
    %0 = vector.load %arg1[%c0, %c0_0] : memref<64x16xf32, #tpu.memory_space<vmem>>, vector<64x16xf32>
    %1 = arith.truncf %0 : vector<64x16xf32> to vector<64x16xbf16>
    %c0_1 = arith.constant 0 : index
    %c0_2 = arith.constant 0 : index
    %2 = vector.load %arg2[%c0_1, %c0_2] : memref<16x256xbf16, #tpu.memory_space<vmem>>, vector<16x256xbf16>
    %cst = arith.constant dense<0.000000e+00> : vector<64x256xf32>
    %3 = tpu.matmul %1, %2, %cst {dimension_numbers = #tpu.dot_dimension_numbers<[1], [0], [0], [1], [0, 0, 1, 1], [], []>} : vector<64x16xbf16>, vector<16x256xbf16>, vector<64x256xf32> -> vector<64x256xf32>
    %4 = vector.shape_cast %3 : vector<64x256xf32> to vector<2x32x256xf32>
    %c0_3 = arith.constant 0 : index
    %c0_4 = arith.constant 0 : index
    %5 = vector.load %arg3[%c0_3, %c0_4] : memref<2x256xf32, #tpu.memory_space<vmem>>, vector<1x256xf32>
    %6 = vector.shape_cast %5 : vector<1x256xf32> to vector<1x1x256xf32>
    %c1 = arith.constant 1 : index
    %c0_5 = arith.constant 0 : index
    %7 = vector.load %arg3[%c1, %c0_5] : memref<2x256xf32, #tpu.memory_space<vmem>>, vector<1x256xf32>
    %8 = vector.shape_cast %7 : vector<1x256xf32> to vector<1x1x256xf32>
    %cst_6 = arith.constant dense<0.000000e+00> : vector<2x256xf32>
    %9 = vector.multi_reduction <add>, %4, %cst_6 [1] : vector<2x32x256xf32> to vector<2x256xf32>
    %10 = vector.shape_cast %9 : vector<2x256xf32> to vector<2x1x256xf32>
    %11 = arith.mulf %4, %4 : vector<2x32x256xf32>
    %cst_7 = arith.constant dense<0.000000e+00> : vector<2x256xf32>
    %12 = vector.multi_reduction <add>, %11, %cst_7 [1] : vector<2x32x256xf32> to vector<2x256xf32>
    %13 = vector.shape_cast %12 : vector<2x256xf32> to vector<2x1x256xf32>
    %cst_8 = arith.constant 3.125000e-02 : f32
    %14 = vector.broadcast %cst_8 : f32 to vector<2x1x256xf32>
    %15 = arith.mulf %10, %14 : vector<2x1x256xf32>
    %cst_9 = arith.constant 3.125000e-02 : f32
    %16 = vector.broadcast %cst_9 : f32 to vector<2x1x256xf32>
    %17 = arith.mulf %13, %16 : vector<2x1x256xf32>
    %18 = arith.mulf %15, %15 : vector<2x1x256xf32>
    %19 = arith.subf %17, %18 : vector<2x1x256xf32>
    %cst_10 = arith.constant 0.000000e+00 : f32
    %20 = vector.broadcast %cst_10 : f32 to vector<2x1x256xf32>
    %21 = arith.maximumf %19, %20 : vector<2x1x256xf32>
    %cst_11 = arith.constant 9.99999974E-6 : f32
    %22 = vector.broadcast %cst_11 : f32 to vector<2x1x256xf32>
    %23 = arith.addf %21, %22 : vector<2x1x256xf32>
    %24 = math.rsqrt %23 : vector<2x1x256xf32>
    %25 = vector.broadcast %6 : vector<1x1x256xf32> to vector<2x1x256xf32>
    %26 = arith.mulf %24, %25 : vector<2x1x256xf32>
    %27 = arith.mulf %15, %26 : vector<2x1x256xf32>
    %28 = vector.broadcast %8 : vector<1x1x256xf32> to vector<2x1x256xf32>
    %29 = arith.subf %28, %27 : vector<2x1x256xf32>
    %30 = vector.broadcast %26 : vector<2x1x256xf32> to vector<2x32x256xf32>
    %31 = arith.mulf %4, %30 : vector<2x32x256xf32>
    %32 = vector.broadcast %29 : vector<2x1x256xf32> to vector<2x32x256xf32>
    %33 = arith.addf %31, %32 : vector<2x32x256xf32>
    %34 = vector.extract_strided_slice %33 {offsets = [0, 0, 0], sizes = [2, 32, 128], strides = [1, 1, 1]} : vector<2x32x256xf32> to vector<2x32x128xf32>
    %35 = vector.extract_strided_slice %33 {offsets = [0, 0, 128], sizes = [2, 32, 128], strides = [1, 1, 1]} : vector<2x32x256xf32> to vector<2x32x128xf32>
    %cst_12 = arith.constant 0.000000e+00 : f32
    %36 = vector.broadcast %cst_12 : f32 to vector<2x32x128xf32>
    %37 = arith.subf %36, %35 : vector<2x32x128xf32>
    %38 = math.exp %37 : vector<2x32x128xf32>
    %cst_13 = arith.constant 1.000000e+00 : f32
    %39 = vector.broadcast %cst_13 : f32 to vector<2x32x128xf32>
    %40 = arith.addf %39, %38 : vector<2x32x128xf32>
    %41 = tpu.reciprocal %40 : vector<2x32x128xf32> -> vector<2x32x128xf32>
    %42 = arith.mulf %34, %41 : vector<2x32x128xf32>
    %43 = vector.shape_cast %42 : vector<2x32x128xf32> to vector<64x128xf32>
    %44 = vector.extract_strided_slice %43 {offsets = [0, 0], sizes = [64, 8], strides = [1, 1]} : vector<64x128xf32> to vector<64x8xf32>
    %c0_14 = arith.constant 0 : index
    %c0_15 = arith.constant 0 : index
    %45 = vector.load %arg4[%c0_14, %c0_15] : memref<64x8xf32, #tpu.memory_space<vmem>>, vector<64x8xf32>
    tpu.vector_store %arg4[%c0_14, %c0_15], %44 {strides = array<i32>} : memref<64x8xf32, #tpu.memory_space<vmem>>, vector<64x8xf32>,
    return
  }
  func.func @transform_0(%arg0: i32) -> (i32, i32) {
    %c0_i32 = arith.constant 0 : i32
    %c0_i32_0 = arith.constant 0 : i32
    return %arg0, %c0_i32 : i32, i32
  }
  func.func @transform_1(%arg0: i32) -> (i32, i32) {
    %c0_i32 = arith.constant 0 : i32
    %c0_i32_0 = arith.constant 0 : i32
    %c0_i32_1 = arith.constant 0 : i32
    return %c0_i32, %c0_i32_0 : i32, i32
  }
  func.func @transform_2(%arg0: i32) -> (i32, i32) {
    %c0_i32 = arith.constant 0 : i32
    %c0_i32_0 = arith.constant 0 : i32
    %c0_i32_1 = arith.constant 0 : i32
    return %c0_i32, %c0_i32_0 : i32, i32
  }
  func.func @transform_3(%arg0: i32) -> (i32, i32) {
    %c0_i32 = arith.constant 0 : i32
    %c0_i32_0 = arith.constant 0 : i32
    return %arg0, %c0_i32 : i32, i32
  }
}

</mosaic_0001>

<llo_original>
// kernel: tpu_custom_call.1
$region0: #{tpu_custom_call.1}
  #allocation0 [shape = 'u32[]', space=smem, size = 0x4, offset = 0x4, fixed_abs, tag = 'smem constant byte address 0x4 - core index']
  #allocation1 [shape = 'u32[144,128]{1,0:T(1,128)}', space=vmem, size = 0x12000, scoped, tag = 'internal scratch']
  %s0 = inlined_call_operand.vmem [shape: f32[256,16], index: 0, kind: input, shape index: {}]
  %s1 = inlined_call_operand.vmem [shape: bf16[16,256], index: 1, kind: input, shape index: {}]
  %s2 = inlined_call_operand.vmem [shape: f32[2,256], index: 2, kind: input, shape index: {}]
  %s3 = inlined_call_operand.vmem [shape: f32[256,8], index: 3, kind: output, shape index: {}]
  %s4 = sld [smem:[#allocation0]]
  $region45: #{tpu_custom_call.1} parent=0
    _
  %s6 = ssub.s32 1, %s4
  %s7 = scalar_select 0, %s6, %s4
  loop: start=0, step=1, limit=6
  $region2: #{tpu_custom_call.1} parent=0 // loop_pre_header
    _
  $region3: #{tpu_custom_call.1} parent=0 // loop_header
    %s9 = sphi 0, %s13
    %p10 = scmp.ge.s32.totalorder %s9, 6
    %s19 = sphi 0, %s21
    %s22 = sphi 0, %s19
    %s23 = sphi 0, %s22
    %s39 = sphi 0, %s23
    %s43 = sphi 0, %s43
    %s45 = sphi 0, %s43
    %s46 = sphi 0, %s45
    %s60 = sphi 0, %s46
    %s64 = sphi 0, %s64
    %s66 = sphi 0, %s64
    %s67 = sphi 0, %s66
    %s81 = sphi 0, %s67
    %s87 = sphi 0, %s89
    %s90 = sphi 0, %s87
    %s91 = sphi 0, %s90
    %s107 = sphi 0, %s91
  $region4: #{tpu_custom_call.1} parent=0 // loop_header_branch
    %12 = sbr.rel (%p10) target = $region8
  $region5: #{tpu_custom_call.1} parent=0 // loop_body
    %s14 = ssub.s32 %s9, 1
    %s15 = ssub.s32 %s9, 2
    %s16 = sadd.s32 %s9, 1
    %s17 = ssub.s32 %s9, %s16
    %p18 = scmp.eq.s32.totalorder %s17, 0
    %s20 = sadd.s32 %s19, 1
    %s21 = scalar_select %p18, %s19, %s20
    %p24 = pneg %p18
    %p25 = scmp.eq.s32.totalorder %s9, 3
    %p26 = por %p24, %p25
    %p27 = scmp.ne.s32.totalorder %s19, %s22
    %p28 = scmp.eq.s32.totalorder %s9, 0
    %p29 = por %p27, %p28
    %p30 = scmp.ne.s32.totalorder %s19, %s22
    %p31 = scmp.eq.s32.totalorder %s14, 3
    %p32 = por %p30, %p31
    %p33 = scmp.ne.s32.totalorder %s22, %s23
    %p34 = scmp.eq.s32.totalorder %s14, 0
    %p35 = por %p33, %p34
    %p36 = scmp.ne.s32.totalorder %s22, %s23
    %p37 = scmp.eq.s32.totalorder %s15, 3
    %p38 = por %p36, %p37
    %p40 = scmp.ne.s32.totalorder %s23, %s39
    %p41 = scmp.eq.s32.totalorder %s15, 0
    %p42 = por %p40, %p41
    %s44 = sadd.s32 %s43, 1
    %p47 = scmp.eq.s32.totalorder %s9, 3
    %p48 = scmp.ne.s32.totalorder %s43, %s45
    %p49 = scmp.eq.s32.totalorder %s9, 0
    %p50 = por %p48, %p49
    %p51 = scmp.ne.s32.totalorder %s43, %s45
    %p52 = scmp.eq.s32.totalorder %s14, 3
    %p53 = por %p51, %p52
    %p54 = scmp.ne.s32.totalorder %s45, %s46
    %p55 = scmp.eq.s32.totalorder %s14, 0
    %p56 = por %p54, %p55
    %p57 = scmp.ne.s32.totalorder %s45, %s46
    %p58 = scmp.eq.s32.totalorder %s15, 3
    %p59 = por %p57, %p58
    %p61 = scmp.ne.s32.totalorder %s46, %s60
    %p62 = scmp.eq.s32.totalorder %s15, 0
    %p63 = por %p61, %p62
    %s65 = sadd.s32 %s64, 1
    %p68 = scmp.eq.s32.totalorder %s9, 3
    %p69 = scmp.ne.s32.totalorder %s64, %s66
    %p70 = scmp.eq.s32.totalorder %s9, 0
    %p71 = por %p69, %p70
    %p72 = scmp.ne.s32.totalorder %s64, %s66
    %p73 = scmp.eq.s32.totalorder %s14, 3
    %p74 = por %p72, %p73
    %p75 = scmp.ne.s32.totalorder %s66, %s67
    %p76 = scmp.eq.s32.totalorder %s14, 0
    %p77 = por %p75, %p76
    %p78 = scmp.ne.s32.totalorder %s66, %s67
    %p79 = scmp.eq.s32.totalorder %s15, 3
    %p80 = por %p78, %p79
    %p82 = scmp.ne.s32.totalorder %s67, %s81
    %p83 = scmp.eq.s32.totalorder %s15, 0
    %p84 = por %p82, %p83
    %s85 = ssub.s32 %s9, %s16
    %p86 = scmp.eq.s32.totalorder %s85, 0
    %s88 = sadd.s32 %s87, 1
    %s89 = scalar_select %p86, %s87, %s88
    %p92 = pneg %p86
    %p93 = scmp.eq.s32.totalorder %s9, 3
    %p94 = por %p92, %p93
    %p95 = scmp.ne.s32.totalorder %s87, %s90
    %p96 = scmp.eq.s32.totalorder %s9, 0
    %p97 = por %p95, %p96
    %p98 = scmp.ne.s32.totalorder %s87, %s90
    %p99 = scmp.eq.s32.totalorder %s14, 3
    %p100 = por %p98, %p99
    %p101 = scmp.ne.s32.totalorder %s90, %s91
    %p102 = scmp.eq.s32.totalorder %s14, 0
    %p103 = por %p101, %p102
    %p104 = scmp.ne.s32.totalorder %s90, %s91
    %p105 = scmp.eq.s32.totalorder %s15, 3
    %p106 = por %p104, %p105
    %p108 = scmp.ne.s32.totalorder %s91, %s107
    %p109 = scmp.eq.s32.totalorder %s15, 0
    %p110 = por %p108, %p109
    %p111 = scmp.le.s32.totalorder 1, %s9
    %p112 = scmp.lt.s32.totalorder %s9, 5
    %p113 = pnand %p111, %p112
    %p114 = pneg %p113
    // Predicated region
    $region9: #{tpu_custom_call.1} parent=5 // pred_check
      _
    $region10: #{tpu_custom_call.1} parent=5 // pred_check_branch
      %116 = sbr.rel (%p113) target = $region12
    $region11: #{tpu_custom_call.1} parent=5 // pred_region
      %s117 = ssub.s32 %s9, 1
      // Predicated region
      $region13: #{tpu_custom_call.1} parent=11 // pred_check
        %p118 = pneg %p56
      $region14: #{tpu_custom_call.1} parent=11 // pred_check_branch
        %120 = sbr.rel (%p118) target = $region16
      $region15: #{tpu_custom_call.1} parent=11 // pred_region
        _
      $region16: #{tpu_custom_call.1} parent=11 // pred_fallthru
        _
      // Predicated region
      $region17: #{tpu_custom_call.1} parent=11 // pred_check
        %p121 = pneg %p77
      $region18: #{tpu_custom_call.1} parent=11 // pred_check_branch
        %123 = sbr.rel (%p121) target = $region20
      $region19: #{tpu_custom_call.1} parent=11 // pred_region
        _
      $region20: #{tpu_custom_call.1} parent=11 // pred_fallthru
        _
    $region12: #{tpu_custom_call.1} parent=5 // pred_fallthru
      _
    %p124 = scmp.lt.s32.totalorder %s9, 4
    // Predicated region
    $region21: #{tpu_custom_call.1} parent=5 // pred_check
      %p125 = pneg %p124
    $region22: #{tpu_custom_call.1} parent=5 // pred_check_branch
      %127 = sbr.rel (%p125) target = $region24
    $region23: #{tpu_custom_call.1} parent=5 // pred_region
      // Predicated region
      $region25: #{tpu_custom_call.1} parent=23 // pred_check
        %p128 = pneg %p29
      $region26: #{tpu_custom_call.1} parent=23 // pred_check_branch
        %130 = sbr.rel (%p128) target = $region28
      $region27: #{tpu_custom_call.1} parent=23 // pred_region
        %s131 = smul.u32 8, %s9
        %p132 = scmp.lt.s32.totalorder %s131, 31
        %s133 = scalar_select %p132, %s131, 31
        %s134 = smul.addr %s133, 8
        %s135 = scalar_lea.vmem %s0, %s134
        %s136 = smul.u32 8, %s9
      $region28: #{tpu_custom_call.1} parent=23 // pred_fallthru
        _
    $region24: #{tpu_custom_call.1} parent=5 // pred_fallthru
      _
    %p137 = scmp.le.s32.totalorder 1, %s9
    %p138 = scmp.lt.s32.totalorder %s9, 5
    %p139 = pnand %p137, %p138
    %p140 = pneg %p139
    // Predicated region
    $region29: #{tpu_custom_call.1} parent=5 // pred_check
      _
    $region30: #{tpu_custom_call.1} parent=5 // pred_check_branch
      %142 = sbr.rel (%p139) target = $region32
    $region31: #{tpu_custom_call.1} parent=5 // pred_region
      %s143 = ssub.s32 %s9, 1
      %s144 = smul.u32 8, %s14
      %p145 = scmp.lt.s32.totalorder %s144, 31
      %s146 = scalar_select %p145, %s144, 31
      %s147 = smul.addr %s146, 8
      %s148 = scalar_lea.vmem %s0, %s147
      %p149 = pneg %p35
      %p150 = pneg %p32
      %p151 = pneg %p56
      %p152 = pneg %p53
      %p153 = pneg %p77
      %p154 = pneg %p74
      %p155 = pneg %p103
      %p156 = pneg %p100
      %s157 = smul.u32 8, %s14
      %p158 = scmp.lt.s32.totalorder %s157, 31
      %s159 = scalar_select %p158, %s157, 31
      %s160 = smul.addr %s159, 8
      %s161 = scalar_lea.vmem %s3, %s160
      %s162 = smul.u32 8, %s14
      %p163 = scmp.lt.s32.totalorder %s162, 31
      %s164 = scalar_select %p163, %s162, 31
      %s165 = smul.addr %s164, 8
      %s166 = scalar_lea.vmem %s0, %s165
      %s167 = smul.u32 8, %s14
      %s168 = smul.u32 8, %s14
      %p169 = scmp.lt.s32.totalorder %s168, 31
      %s170 = scalar_select %p169, %s168, 31
      %s171 = smul.addr %s170, 8
      %s172 = scalar_lea.vmem %s3, %s171
      %s173 = smul.u32 8, %s14
      %v175 = vld [vmem:[%s166] sm:$0xff]
      %v176 = vld [vmem:[%s166 + $0x8] sm:$0xff]
      %v177 = vld [vmem:[%s166 + $0x10] sm:$0xff]
      %v178 = vld [vmem:[%s166 + $0x18] sm:$0xff]
      %v179 = vld [vmem:[%s166 + $0x20] sm:$0xff]
      %v180 = vld [vmem:[%s166 + $0x28] sm:$0xff]
      %v181 = vld [vmem:[%s166 + $0x30] sm:$0xff]
      %v182 = vld [vmem:[%s166 + $0x38] sm:$0xff]
      %v183 = vpack.c.bf16 %v176, %v175
      %v184 = vpack.c.bf16 %v178, %v177
      %v185 = vpack.c.bf16 %v180, %v179
      %v186 = vpack.c.bf16 %v182, %v181
      %v187 = vld [vmem:[%s1] sm:$0xff]
      %v188 = vld [vmem:[%s1 + $0x8] sm:$0xff]
      %v191 = vunpack.c.l.b16 %v187
      %v192 = vunpack.c.h.b16 %v187
      %v193 = vunpack.c.l.b16 %v188
      %v194 = vunpack.c.h.b16 %v188
      %v195 = vpack.c.b16 %v193, %v191
      %v196 = vpack.c.b16 %v194, %v192
      %vm199 = vcmask 130048
      %v201 = vsel %vm199, %v183, 0
      %v204 = vsel %vm199, %v184, 0
      %v207 = vsel %vm199, %v185, 0
      %v210 = vsel %vm199, %v186, 0
      %212 = vmatprep.subr.bf16.mxu0 0
      %213 = vmatpush1.bf16.msra.mxu0 0
      %214 = vmatprep.subr.bf16.mxu0 0
      %215 = vmatpush1.bf16.msra.mxu0 0
      %216 = vmatprep.subr.bf16.mxu0 0
      %217 = vmatpush1.bf16.msra.mxu0 0
      %218 = vmatprep.subr.bf16.mxu0 0
      %219 = vmatpush1.bf16.msra.mxu0 0
      %220 = vmatprep.subr.bf16.mxu0 0
      %221 = vmatpush1.bf16.msra.mxu0 0
      %222 = vmatprep.subr.bf16.mxu0 0
      %223 = vmatpush1.bf16.msra.mxu0 0
      %224 = vmatprep.subr.bf16.mxu0 0
      %225 = vmatpush1.bf16.msra.mxu0 0
      %226 = vmatprep.subr.bf16.mxu0 %v196
      %227 = vmatpush1.bf16.msra.mxu0 %v195
      %228 = vmatprep.subr.bf16.mxu0 0
      %229 = vmatpush2.bf16.msra.mxu0 0
      %230 = vmatprep.subr.bf16.mxu0 0
      %231 = vmatpush2.bf16.msra.mxu0 0
      %232 = vmatprep.subr.bf16.mxu0 0
      %233 = vmatpush2.bf16.msra.mxu0 0
      %234 = vmatprep.subr.bf16.mxu0 0
      %235 = vmatpush2.bf16.msra.mxu0 0
      %236 = vmatprep.subr.bf16.mxu0 0
      %237 = vmatpush2.bf16.msra.mxu0 0
      %238 = vmatprep.subr.bf16.mxu0 0
      %239 = vmatpush2.bf16.msra.mxu0 0
      %240 = vmatprep.subr.bf16.mxu0 0
      %241 = vmatpush2.bf16.msra.mxu0 0
      %242 = vmatprep.subr.bf16.mxu0 0
      %243 = vmatpush2.bf16.msra.mxu0 0
      %244 = vmatprep.mubr.bf16.mxu0 0
      %245 = vmatmul.mubr.bf16.gmra.mxu0 %v201
      %v246 = vpop.f32.mrf.mxu0
      %v247 = vadd.f32 0.0, %v246
      %v248 = vpop.f32.mrf.mxu0
      %v249 = vadd.f32 0.0, %v248
      %v250 = vpop.f32.mrf.mxu0
      %v251 = vadd.f32 0.0, %v250
      %v252 = vpop.f32.mrf.mxu0
      %v253 = vadd.f32 0.0, %v252
      %254 = vmatprep.mubr.bf16.mxu0 0
      %255 = vmatmul.mubr.bf16.gmra.mxu0 %v204
      %v256 = vpop.f32.mrf.mxu0
      %v257 = vadd.f32 0.0, %v256
      %v258 = vpop.f32.mrf.mxu0
      %v259 = vadd.f32 0.0, %v258
      %v260 = vpop.f32.mrf.mxu0
      %v261 = vadd.f32 0.0, %v260
      %v262 = vpop.f32.mrf.mxu0
      %v263 = vadd.f32 0.0, %v262
      %264 = vmatprep.mubr.bf16.mxu0 0
      %265 = vmatmul.mubr.bf16.gmra.mxu0 %v207
      %v266 = vpop.f32.mrf.mxu0
      %v267 = vadd.f32 0.0, %v266
      %v268 = vpop.f32.mrf.mxu0
      %v269 = vadd.f32 0.0, %v268
      %v270 = vpop.f32.mrf.mxu0
      %v271 = vadd.f32 0.0, %v270
      %v272 = vpop.f32.mrf.mxu0
      %v273 = vadd.f32 0.0, %v272
      %274 = vmatprep.mubr.bf16.mxu0 0
      %275 = vmatmul.mubr.bf16.gmra.mxu0 %v210
      %v276 = vpop.f32.mrf.mxu0
      %v277 = vadd.f32 0.0, %v276
      %v278 = vpop.f32.mrf.mxu0
      %v279 = vadd.f32 0.0, %v278
      %v280 = vpop.f32.mrf.mxu0
      %v281 = vadd.f32 0.0, %v280
      %v282 = vpop.f32.mrf.mxu0
      %v283 = vadd.f32 0.0, %v282
      %284 = vdwg.mxu0
      %v285 = vld [vmem:[%s2] ss:$2 sm:$0x3]
      %s286 = scalar_lea.vmem %s2, 1
      %v287 = vld [vmem:[%s286] ss:$2 sm:$0x3]
      %v288 = vadd.f32 %v247, %v251
      %v289 = vadd.f32 %v288, %v257
      %v290 = vadd.f32 %v289, %v261
      %v291 = vrot.slane %v290, 4
      %v292 = vadd.f32 %v290, %v291
      %v293 = vrot.slane %v292, 2
      %v294 = vadd.f32 %v292, %v293
      %v295 = vrot.slane %v294, 1
      %v296 = vadd.f32 %v294, %v295
      %v297 = vadd.f32 %v249, %v253
      %v298 = vadd.f32 %v297, %v259
      %v299 = vadd.f32 %v298, %v263
      %v300 = vrot.slane %v299, 4
      %v301 = vadd.f32 %v299, %v300
      %v302 = vrot.slane %v301, 2
      %v303 = vadd.f32 %v301, %v302
      %v304 = vrot.slane %v303, 1
      %v305 = vadd.f32 %v303, %v304
      %v306 = vadd.f32 %v267, %v271
      %v307 = vadd.f32 %v306, %v277
      %v308 = vadd.f32 %v307, %v281
      %v309 = vrot.slane %v308, 4
      %v310 = vadd.f32 %v308, %v309
      %v311 = vrot.slane %v310, 2
      %v312 = vadd.f32 %v310, %v311
      %v313 = vrot.slane %v312, 1
      %v314 = vadd.f32 %v312, %v313
      %v315 = vadd.f32 %v269, %v273
      %v316 = vadd.f32 %v315, %v279
      %v317 = vadd.f32 %v316, %v283
      %v318 = vrot.slane %v317, 4
      %v319 = vadd.f32 %v317, %v318
      %v320 = vrot.slane %v319, 2
      %v321 = vadd.f32 %v319, %v320
      %v322 = vrot.slane %v321, 1
      %v323 = vadd.f32 %v321, %v322
      %v324 = vmul.f32 %v247, %v247
      %v325 = vmul.f32 %v249, %v249
      %v326 = vmul.f32 %v251, %v251
      %v327 = vmul.f32 %v253, %v253
      %v328 = vmul.f32 %v257, %v257
      %v329 = vmul.f32 %v259, %v259
      %v330 = vmul.f32 %v261, %v261
      %v331 = vmul.f32 %v263, %v263
      %v332 = vmul.f32 %v267, %v267
      %v333 = vmul.f32 %v269, %v269
      %v334 = vmul.f32 %v271, %v271
      %v335 = vmul.f32 %v273, %v273
      %v336 = vmul.f32 %v277, %v277
      %v337 = vmul.f32 %v279, %v279
      %v338 = vmul.f32 %v281, %v281
      %v339 = vmul.f32 %v283, %v283
      %v340 = vadd.f32 %v324, %v326
      %v341 = vadd.f32 %v340, %v328
      %v342 = vadd.f32 %v341, %v330
      %v343 = vrot.slane %v342, 4
      %v344 = vadd.f32 %v342, %v343
      %v345 = vrot.slane %v344, 2
      %v346 = vadd.f32 %v344, %v345
      %v347 = vrot.slane %v346, 1
      %v348 = vadd.f32 %v346, %v347
      %v349 = vadd.f32 %v325, %v327
      %v350 = vadd.f32 %v349, %v329
      %v351 = vadd.f32 %v350, %v331
      %v352 = vrot.slane %v351, 4
      %v353 = vadd.f32 %v351, %v352
      %v354 = vrot.slane %v353, 2
      %v355 = vadd.f32 %v353, %v354
      %v356 = vrot.slane %v355, 1
      %v357 = vadd.f32 %v355, %v356
      %v358 = vadd.f32 %v332, %v334
      %v359 = vadd.f32 %v358, %v336
      %v360 = vadd.f32 %v359, %v338
      %v361 = vrot.slane %v360, 4
      %v362 = vadd.f32 %v360, %v361
      %v363 = vrot.slane %v362, 2
      %v364 = vadd.f32 %v362, %v363
      %v365 = vrot.slane %v364, 1
      %v366 = vadd.f32 %v364, %v365
      %v367 = vadd.f32 %v333, %v335
      %v368 = vadd.f32 %v367, %v337
      %v369 = vadd.f32 %v368, %v339
      %v370 = vrot.slane %v369, 4
      %v371 = vadd.f32 %v369, %v370
      %v372 = vrot.slane %v371, 2
      %v373 = vadd.f32 %v371, %v372
      %v374 = vrot.slane %v373, 1
      %v375 = vadd.f32 %v373, %v374
      %v376 = vmul.f32 %v296, 0.03125
      %v377 = vmul.f32 %v305, 0.03125
      %v378 = vmul.f32 %v314, 0.03125
      %v379 = vmul.f32 %v323, 0.03125
      %v380 = vmul.f32 %v348, 0.03125
      %v381 = vmul.f32 %v357, 0.03125
      %v382 = vmul.f32 %v366, 0.03125
      %v383 = vmul.f32 %v375, 0.03125
      %v384 = vmul.f32 %v376, %v376
      %v385 = vmul.f32 %v377, %v377
      %v386 = vmul.f32 %v378, %v378
      %v387 = vmul.f32 %v379, %v379
      %v388 = vsub.f32 %v380, %v384
      %v389 = vsub.f32 %v381, %v385
      %v390 = vsub.f32 %v382, %v386
      %v391 = vsub.f32 %v383, %v387
      %v392 = vmax.f32 %v388, 0.0
      %v393 = vmax.f32 %v389, 0.0
      %v394 = vmax.f32 %v390, 0.0
      %v395 = vmax.f32 %v391, 0.0
      %v396 = vadd.f32 %v392, 1e-05
      %v397 = vadd.f32 %v393, 1e-05
      %v398 = vadd.f32 %v394, 1e-05
      %v399 = vadd.f32 %v395, 1e-05
      %v400 = vrsqrt.pop %v396
      %v401 = vrsqrt.pop %v397
      %v402 = vrsqrt.pop %v398
      %v403 = vrsqrt.pop %v399
      %v405 = vlaneseq
      %v406 = vshrl.u32 %v405, 7
      %v407 = vsub.s32 0, %v406
      %v408 = vrot.slane %v285, %v407
      %v409 = vlaneseq
      %v410 = vshrl.u32 %v409, 7
      %v411 = vsub.s32 1, %v410
      %v412 = vrot.slane %v285, %v411
      %v415 = vmul.f32 %v400, %v408
      %v416 = vmul.f32 %v401, %v412
      %v417 = vmul.f32 %v402, %v408
      %v418 = vmul.f32 %v403, %v412
      %v419 = vmul.f32 %v376, %v415
      %v420 = vmul.f32 %v377, %v416
      %v421 = vmul.f32 %v378, %v417
      %v422 = vmul.f32 %v379, %v418
      %v427 = vcombine.low %v419, %v420
      %v429 = vunpack.c.l.s4 1966171168
      %v430 = vunpack.c.0.s8 %v429
      %v431 = vlaneseq
      %v432 = vshrl.u32 %v431, 7
      %v433 = vsub.s32 %v430, %v432
      %v434 = vrot.slane %v427, %v433
      %v436 = vunpack.c.l.s4 1966171168
      %v437 = vunpack.c.0.s8 %v436
      %v438 = vlaneseq
      %v439 = vshrl.u32 %v438, 7
      %v440 = vsub.s32 %v437, %v439
      %v441 = vrot.slane %v434, %v440
      %v442 = vcombine.low %v421, %v422
      %v444 = vunpack.c.l.s4 1966171168
      %v445 = vunpack.c.0.s8 %v444
      %v446 = vlaneseq
      %v447 = vshrl.u32 %v446, 7
      %v448 = vsub.s32 %v445, %v447
      %v449 = vrot.slane %v442, %v448
      %v451 = vunpack.c.l.s4 1966171168
      %v452 = vunpack.c.0.s8 %v451
      %v453 = vlaneseq
      %v454 = vshrl.u32 %v453, 7
      %v455 = vsub.s32 %v452, %v454
      %v456 = vrot.slane %v449, %v455
      %v459 = vsub.f32 %v287, %v441
      %v460 = vsub.f32 %v287, %v456
      %v461 = vlaneseq
      %v462 = vshrl.u32 %v461, 7
      %v463 = vsub.s32 0, %v462
      %v464 = vrot.slane %v415, %v463
      %v465 = vlaneseq
      %v466 = vshrl.u32 %v465, 7
      %v467 = vsub.s32 0, %v466
      %v468 = vrot.slane %v416, %v467
      %v469 = vlaneseq
      %v470 = vshrl.u32 %v469, 7
      %v471 = vsub.s32 0, %v470
      %v472 = vrot.slane %v417, %v471
      %v473 = vlaneseq
      %v474 = vshrl.u32 %v473, 7
      %v475 = vsub.s32 0, %v474
      %v476 = vrot.slane %v418, %v475
      %v477 = vmul.f32 %v247, %v464
      %v478 = vmul.f32 %v249, %v468
      %v479 = vmul.f32 %v251, %v464
      %v480 = vmul.f32 %v253, %v468
      %v481 = vmul.f32 %v257, %v464
      %v482 = vmul.f32 %v259, %v468
      %v483 = vmul.f32 %v261, %v464
      %v484 = vmul.f32 %v263, %v468
      %v485 = vmul.f32 %v267, %v472
      %v486 = vmul.f32 %v269, %v476
      %v487 = vmul.f32 %v271, %v472
      %v488 = vmul.f32 %v273, %v476
      %v489 = vmul.f32 %v277, %v472
      %v490 = vmul.f32 %v279, %v476
      %v491 = vmul.f32 %v281, %v472
      %v492 = vmul.f32 %v283, %v476
      %v495 = vlaneseq
      %v496 = vshrl.u32 %v495, 7
      %v497 = vsub.s32 0, %v496
      %v498 = vrot.slane %v459, %v497
      %v499 = vlaneseq
      %v500 = vshrl.u32 %v499, 7
      %v501 = vsub.s32 1, %v500
      %v502 = vrot.slane %v459, %v501
      %v503 = vlaneseq
      %v504 = vshrl.u32 %v503, 7
      %v505 = vsub.s32 0, %v504
      %v506 = vrot.slane %v460, %v505
      %v507 = vlaneseq
      %v508 = vshrl.u32 %v507, 7
      %v509 = vsub.s32 1, %v508
      %v510 = vrot.slane %v460, %v509
      %v515 = vadd.f32 %v477, %v498
      %v516 = vadd.f32 %v478, %v502
      %v517 = vadd.f32 %v479, %v498
      %v518 = vadd.f32 %v480, %v502
      %v519 = vadd.f32 %v481, %v498
      %v520 = vadd.f32 %v482, %v502
      %v521 = vadd.f32 %v483, %v498
      %v522 = vadd.f32 %v484, %v502
      %v523 = vadd.f32 %v485, %v506
      %v524 = vadd.f32 %v486, %v510
      %v525 = vadd.f32 %v487, %v506
      %v526 = vadd.f32 %v488, %v510
      %v527 = vadd.f32 %v489, %v506
      %v528 = vadd.f32 %v490, %v510
      %v529 = vadd.f32 %v491, %v506
      %v530 = vadd.f32 %v492, %v510
      %v531 = vsub.f32 0.0, %v516
      %v532 = vsub.f32 0.0, %v518
      %v533 = vsub.f32 0.0, %v520
      %v534 = vsub.f32 0.0, %v522
      %v535 = vsub.f32 0.0, %v524
      %v536 = vsub.f32 0.0, %v526
      %v537 = vsub.f32 0.0, %v528
      %v538 = vsub.f32 0.0, %v530
      %v539 = vmul.f32 %v531, 1.442695
      %v540 = vpow.pop %v539
      %v541 = vmul.f32 %v532, 1.442695
      %v542 = vpow.pop %v541
      %v543 = vmul.f32 %v533, 1.442695
      %v544 = vpow.pop %v543
      %v545 = vmul.f32 %v534, 1.442695
      %v546 = vpow.pop %v545
      %v547 = vmul.f32 %v535, 1.442695
      %v548 = vpow.pop %v547
      %v549 = vmul.f32 %v536, 1.442695
      %v550 = vpow.pop %v549
      %v551 = vmul.f32 %v537, 1.442695
      %v552 = vpow.pop %v551
      %v553 = vmul.f32 %v538, 1.442695
      %v554 = vpow.pop %v553
      %v555 = vadd.f32 %v540, 1.0
      %v556 = vadd.f32 %v542, 1.0
      %v557 = vadd.f32 %v544, 1.0
      %v558 = vadd.f32 %v546, 1.0
      %v559 = vadd.f32 %v548, 1.0
      %v560 = vadd.f32 %v550, 1.0
      %v561 = vadd.f32 %v552, 1.0
      %v562 = vadd.f32 %v554, 1.0
      %v563 = vrcp.pop %v555
      %v564 = vrcp.pop %v556
      %v565 = vrcp.pop %v557
      %v566 = vrcp.pop %v558
      %v567 = vrcp.pop %v559
      %v568 = vrcp.pop %v560
      %v569 = vrcp.pop %v561
      %v570 = vrcp.pop %v562
      %v571 = vmul.f32 %v515, %v563
      %v572 = vmul.f32 %v517, %v564
      %v573 = vmul.f32 %v519, %v565
      %v574 = vmul.f32 %v521, %v566
      %v575 = vmul.f32 %v523, %v567
      %v576 = vmul.f32 %v525, %v568
      %v577 = vmul.f32 %v527, %v569
      %v578 = vmul.f32 %v529, %v570
      %vm579 = vcmask 64512
      %580 = vst.msk [vmem:[%s172] sm:$0xff] %vm579, %v571
      %581 = vst.msk [vmem:[%s172 + $0x8] sm:$0xff] %vm579, %v572
      %582 = vst.msk [vmem:[%s172 + $0x10] sm:$0xff] %vm579, %v573
      %583 = vst.msk [vmem:[%s172 + $0x18] sm:$0xff] %vm579, %v574
      %584 = vst.msk [vmem:[%s172 + $0x20] sm:$0xff] %vm579, %v575
      %585 = vst.msk [vmem:[%s172 + $0x28] sm:$0xff] %vm579, %v576
      %586 = vst.msk [vmem:[%s172 + $0x30] sm:$0xff] %vm579, %v577
      %587 = vst.msk [vmem:[%s172 + $0x38] sm:$0xff] %vm579, %v578
      %s588 = smul.u32 8, %s14
      %p589 = scmp.lt.s32.totalorder %s588, 31
      %s590 = scalar_select %p589, %s588, 31
      %s591 = smul.addr %s590, 8
      %s592 = scalar_lea.vmem %s3, %s591
      // Predicated region
      $region33: #{tpu_custom_call.1} parent=31 // pred_check
        %p593 = pneg %p100
      $region34: #{tpu_custom_call.1} parent=31 // pred_check_branch
        %595 = sbr.rel (%p593) target = $region36
      $region35: #{tpu_custom_call.1} parent=31 // pred_region
        %s596 = smul.u32 8, %s14
      $region36: #{tpu_custom_call.1} parent=31 // pred_fallthru
        _
    $region32: #{tpu_custom_call.1} parent=5 // pred_fallthru
      _
    %p597 = scmp.le.s32.totalorder 2, %s9
    // Predicated region
    $region37: #{tpu_custom_call.1} parent=5 // pred_check
      %p598 = pneg %p597
    $region38: #{tpu_custom_call.1} parent=5 // pred_check_branch
      %600 = sbr.rel (%p598) target = $region40
    $region39: #{tpu_custom_call.1} parent=5 // pred_region
      %s601 = ssub.s32 %s9, 2
      // Predicated region
      $region41: #{tpu_custom_call.1} parent=39 // pred_check
        %p602 = pneg %p106
      $region42: #{tpu_custom_call.1} parent=39 // pred_check_branch
        %604 = sbr.rel (%p602) target = $region44
      $region43: #{tpu_custom_call.1} parent=39 // pred_region
        %s605 = smul.u32 8, %s15
        %p606 = scmp.lt.s32.totalorder %s605, 31
        %s607 = scalar_select %p606, %s605, 31
        %s608 = smul.addr %s607, 8
        %s609 = scalar_lea.vmem %s3, %s608
      $region44: #{tpu_custom_call.1} parent=39 // pred_fallthru
        _
    $region40: #{tpu_custom_call.1} parent=5 // pred_fallthru
      _
  $region6: #{tpu_custom_call.1} parent=0 // loop_footer
    %s13 = sadd.s32 1, %s9
  $region7: #{tpu_custom_call.1} parent=0 // loop_footer_branch
    %8 = sbr.rel target = $region3
  $region8: #{tpu_custom_call.1} parent=0 // loop_exit
    _

</llo_original>
